<compile_context>
chip_gen: v7x
topology: tpu7x:2x2x1
jax: 0.10.0
libtpu: 0.0.40
codegen_flags: <defaults>
</compile_context>

<pallas_src>
import functools

import jax
import jax.numpy as jnp
from jax import lax
from jax.experimental import pallas as pl
from jax.experimental.pallas import tpu as pltpu


def _round_up(x: int, m: int) -> int:
    return (x + m - 1) // m * m


def _choose_tile(dim_aligned: int, target: int, align: int) -> int:
    """Pick a tile size (multiple of `align`) minimizing padding of `dim_aligned`.

    `dim_aligned` is already a multiple of `align`.
    """
    if dim_aligned <= target:
        return dim_aligned                     # single full-extent tile, zero padding
    if dim_aligned <= target + target // 2:
        return dim_aligned                     # modest overshoot beats padding / extra steps
    best_t, best_pad = align, 0                # `align` always divides dim_aligned
    t = 2 * align
    while t <= target:
        pad = (-dim_aligned) % t
        if pad <= best_pad:                    # ties -> larger tile (fewer grid steps)
            best_t, best_pad = t, pad
        t += align
    return best_t


def _linear_kernel(x_ref, w_ref, b_ref, o_ref):
    # x_ref: (tm, tk)   w_ref: (tn, tk)   b_ref: (1, tn)   o_ref: (tm, tn) f32
    k = pl.program_id(2)

    @pl.when(k == 0)
    def _():
        # Output block is resident across the k axis (its index_map ignores k),
        # so it doubles as the f32 accumulator; fold the bias into the init.
        o_ref[...] = jnp.broadcast_to(b_ref[...], o_ref.shape)

    # Contract the last dim of x with the last dim of w (== x @ w.T) on the MXU
    # without materializing any transpose of the weight.
    o_ref[...] += lax.dot_general(
        x_ref[...],
        w_ref[...],
        dimension_numbers=(((1,), (1,)), ((), ())),
        preferred_element_type=jnp.float32,
    )


@functools.partial(jax.jit, static_argnames=("tm", "tn", "tk", "compute_dtype"))
def linear_model(x, weight, bias, *, tm: int = 512, tn: int = 512, tk: int = 512,
                 compute_dtype=None):
    """Forward pass of LinearModel (a single nn.Linear).

    x:      [B, d_in]      weight: [d_out, d_in] (PyTorch layout)   bias: [d_out]
    returns [B, d_out] in x.dtype (accumulation is always f32).
    compute_dtype: optional narrower operand dtype (e.g. jnp.bfloat16).
    """
    B, d_in = x.shape
    d_out = weight.shape[0]
    out_dtype = x.dtype

    cdt = jnp.dtype(compute_dtype) if compute_dtype is not None else jnp.dtype(x.dtype)
    # Sublane packing: f32 -> 8, bf16 -> 16, int8/fp8 -> 32 rows per vreg tile.
    sub_align = max(8, 32 // cdt.itemsize)

    da_m = _round_up(B, sub_align)
    da_n = _round_up(d_out, 128)
    da_k = _round_up(d_in, 128)

    tm = _choose_tile(da_m, tm, sub_align)
    tn = _choose_tile(da_n, tn, 128)
    tk = _choose_tile(da_k, tk, 128)

    M = _round_up(da_m, tm)
    N = _round_up(da_n, tn)
    K = _round_up(da_k, tk)

    # v7x has 2 TensorCores sharing the "parallel" grid axes: make sure there is
    # more than one parallel output tile when the problem shape allows it.
    # (Harmless no-op on single-TC v5e/v6e.)
    if (M // tm) * (N // tn) == 1:
        if tn % 256 == 0:
            tn //= 2
        elif tm % (2 * sub_align) == 0:
            tm //= 2

    # Cast at the boundary only if a narrower compute dtype was requested.
    x_c = x if x.dtype == cdt else x.astype(cdt)
    w_c = weight if weight.dtype == cdt else weight.astype(cdt)
    b_c = bias if bias.dtype == jnp.float32 else bias.astype(jnp.float32)

    # Skip the HBM-copying pads entirely when already tile-aligned (the common
    # case for model dims) -- the kernel then reads the original W exactly once.
    x_p = x_c if (M, K) == (B, d_in) else jnp.pad(x_c, ((0, M - B), (0, K - d_in)))
    w_p = w_c if (N, K) == (d_out, d_in) else jnp.pad(w_c, ((0, N - d_out), (0, K - d_in)))
    b_p = (b_c if N == d_out else jnp.pad(b_c, (0, N - d_out))).reshape(1, N)

    grid = (M // tm, N // tn, K // tk)

    cost = pl.CostEstimate(
        flops=2 * M * N * K,
        transcendentals=0,
        # Account for re-streaming: x is read once per N-tile, W once per M-tile.
        bytes_accessed=(cdt.itemsize * (M * K * (N // tn) + N * K * (M // tm))
                        + 4 * (M * N + N)),
    )

    out_padded = pl.pallas_call(
        _linear_kernel,
        out_shape=jax.ShapeDtypeStruct((M, N), jnp.float32),
        grid_spec=pltpu.PrefetchScalarGridSpec(
            num_scalar_prefetch=0,
            grid=grid,
            in_specs=[
                pl.BlockSpec((tm, tk), lambda i, j, k: (i, k)),   # x tile
                pl.BlockSpec((tn, tk), lambda i, j, k: (j, k)),   # W tile (native layout)
                pl.BlockSpec((1, tn), lambda i, j, k: (0, j)),    # bias tile
            ],
            out_specs=pl.BlockSpec((tm, tn), lambda i, j, k: (i, j)),
        ),
        compiler_params=pltpu.CompilerParams(
            dimension_semantics=("parallel", "parallel", "arbitrary"),
        ),
        cost_estimate=cost,
    )(x_p, w_p, b_p)

    out = out_padded[:B, :d_out]
    return out if out_dtype == jnp.float32 else out.astype(out_dtype)


if __name__ == "__main__":
    # --- 1) Tiny shapes consistent with LinearModel(input_dim, output_dim) ----
    batch, input_dim, output_dim = 8, 32, 16
    key = jax.random.PRNGKey(0)
    kx, kw, kb = jax.random.split(key, 3)

    x = jax.random.normal(kx, (batch, input_dim), dtype=jnp.float32)
    bound = 1.0 / jnp.sqrt(jnp.float32(input_dim))
    weight = jax.random.uniform(kw, (output_dim, input_dim), dtype=jnp.float32,
                                minval=-bound, maxval=bound)
    bias = jax.random.uniform(kb, (output_dim,), dtype=jnp.float32,
                              minval=-bound, maxval=bound)

    out = linear_model(x, weight, bias)
    jax.block_until_ready(out)
    ref = x @ weight.T + bias
    assert out.shape == (batch, output_dim)
    assert jnp.allclose(out, ref, atol=1e-5, rtol=1e-5)

    # --- 2) Multi-tile, fully aligned shapes (exercises the no-pad fast path) --
    B2, Din2, Dout2 = 384, 1024, 640
    kx2, kw2, kb2 = jax.random.split(jax.random.PRNGKey(1), 3)
    x2 = jax.random.normal(kx2, (B2, Din2), dtype=jnp.float32)
    w2 = jax.random.normal(kw2, (Dout2, Din2), dtype=jnp.float32) * 0.02
    b2 = jax.random.normal(kb2, (Dout2,), dtype=jnp.float32) * 0.02
    out2 = linear_model(x2, w2, b2, tm=128, tn=256, tk=256)
    jax.block_until_ready(out2)
    ref2 = x2 @ w2.T + b2
    assert out2.shape == (B2, Dout2)
    assert jnp.allclose(out2, ref2, atol=2e-4, rtol=2e-4)

    # --- 3) Unaligned shapes (exercises the padded path), f32 and bf16 compute -
    B3, Din3, Dout3 = 100, 300, 70
    kx3, kw3, kb3 = jax.random.split(jax.random.PRNGKey(2), 3)
    x3 = jax.random.normal(kx3, (B3, Din3), dtype=jnp.float32)
    w3 = jax.random.normal(kw3, (Dout3, Din3), dtype=jnp.float32) * 0.05
    b3 = jax.random.normal(kb3, (Dout3,), dtype=jnp.float32) * 0.05
    ref3 = x3 @ w3.T + b3

    out3 = linear_model(x3, w3, b3)
    jax.block_until_ready(out3)
    assert out3.shape == (B3, Dout3)
    assert jnp.allclose(out3, ref3, atol=1e-4, rtol=1e-4)

    out3_bf16 = linear_model(x3, w3, b3, compute_dtype=jnp.bfloat16)
    jax.block_until_ready(out3_bf16)
    assert out3_bf16.shape == (B3, Dout3)
    assert jnp.allclose(out3_bf16, ref3, atol=3e-2, rtol=3e-2)

    print("KERNEL_OK")
</pallas_src>

<mosaic_0001>
module attributes {stable_mosaic.version = 11 : i64} {
  func.func @_linear_kernel(%arg0: i32, %arg1: i32, %arg2: i32, %arg3: memref<8x128xf32, #tpu.memory_space<vmem>>, %arg4: memref<128x128xf32, #tpu.memory_space<vmem>>, %arg5: memref<1x128xf32, #tpu.memory_space<vmem>>, %arg6: memref<8x128xf32, #tpu.memory_space<vmem>>) attributes {dimension_semantics = [#tpu.dimension_semantics<parallel>, #tpu.dimension_semantics<parallel>, #tpu.dimension_semantics<arbitrary>], iteration_bounds = array<i64: 1, 1, 1>, scalar_prefetch = 0 : i64, scratch_operands = 0 : i64, tpu.core_type = #tpu.core_type<tc>, window_params = [{transform_indices = @transform_0, window_bounds = array<i64: 8, 128>}, {transform_indices = @transform_1, window_bounds = array<i64: 128, 128>}, {transform_indices = @transform_2, window_bounds = array<i64: 1, 128>}, {transform_indices = @transform_3, window_bounds = array<i64: 8, 128>}]} {
    %c0_i32 = arith.constant 0 : i32
    %0 = arith.cmpi eq, %arg2, %c0_i32 : i32
    %1 = arith.extui %0 : i1 to i32
    %c0_i32_0 = arith.constant 0 : i32
    %2 = arith.cmpi ne, %1, %c0_i32_0 : i32
    scf.if %2 {
      %c0_8 = arith.constant 0 : index
      %c0_9 = arith.constant 0 : index
      %9 = vector.load %arg5[%c0_8, %c0_9] : memref<1x128xf32, #tpu.memory_space<vmem>>, vector<1x128xf32>
      %10 = vector.shape_cast %9 : vector<1x128xf32> to vector<1x128xf32>
      %11 = vector.broadcast %10 : vector<1x128xf32> to vector<8x128xf32>
      %c0_10 = arith.constant 0 : index
      %c0_11 = arith.constant 0 : index
      %12 = vector.load %arg6[%c0_10, %c0_11] : memref<8x128xf32, #tpu.memory_space<vmem>>, vector<8x128xf32>
      tpu.vector_store %arg6[%c0_10, %c0_11], %11 {strides = array<i32>} : memref<8x128xf32, #tpu.memory_space<vmem>>, vector<8x128xf32>,
    } else {
    }
    %c0 = arith.constant 0 : index
    %c0_1 = arith.constant 0 : index
    %3 = vector.load %arg6[%c0, %c0_1] : memref<8x128xf32, #tpu.memory_space<vmem>>, vector<8x128xf32>
    %c0_2 = arith.constant 0 : index
    %c0_3 = arith.constant 0 : index
    %4 = vector.load %arg3[%c0_2, %c0_3] : memref<8x128xf32, #tpu.memory_space<vmem>>, vector<8x128xf32>
    %c0_4 = arith.constant 0 : index
    %c0_5 = arith.constant 0 : index
    %5 = vector.load %arg4[%c0_4, %c0_5] : memref<128x128xf32, #tpu.memory_space<vmem>>, vector<128x128xf32>
    %cst = arith.constant dense<0.000000e+00> : vector<8x128xf32>
    %6 = tpu.matmul %4, %5, %cst {dimension_numbers = #tpu.dot_dimension_numbers<[1], [1], [0], [0], [0, 0, 1, 0], [], []>} : vector<8x128xf32>, vector<128x128xf32>, vector<8x128xf32> -> vector<8x128xf32>
    %7 = arith.addf %3, %6 : vector<8x128xf32>
    %c0_6 = arith.constant 0 : index
    %c0_7 = arith.constant 0 : index
    %8 = vector.load %arg6[%c0_6, %c0_7] : memref<8x128xf32, #tpu.memory_space<vmem>>, vector<8x128xf32>
    tpu.vector_store %arg6[%c0_6, %c0_7], %7 {strides = array<i32>} : memref<8x128xf32, #tpu.memory_space<vmem>>, vector<8x128xf32>,
    return
  }
  func.func @transform_0(%arg0: i32, %arg1: i32, %arg2: i32) -> (i32, i32) {
    %c0_i32 = arith.constant 0 : i32
    return %arg0, %arg2 : i32, i32
  }
  func.func @transform_1(%arg0: i32, %arg1: i32, %arg2: i32) -> (i32, i32) {
    %c0_i32 = arith.constant 0 : i32
    return %arg1, %arg2 : i32, i32
  }
  func.func @transform_2(%arg0: i32, %arg1: i32, %arg2: i32) -> (i32, i32) {
    %c0_i32 = arith.constant 0 : i32
    %c0_i32_0 = arith.constant 0 : i32
    return %c0_i32, %arg1 : i32, i32
  }
  func.func @transform_3(%arg0: i32, %arg1: i32, %arg2: i32) -> (i32, i32) {
    %c0_i32 = arith.constant 0 : i32
    return %arg0, %arg1 : i32, i32
  }
}

</mosaic_0001>

<llo_original>
// kernel: linear_model.1
$region0: #{linear_model.1}
  #allocation0 [shape = 'u32[]', space=smem, size = 0x4, offset = 0x4, fixed_abs, tag = 'smem constant byte address 0x4 - core index']
  #allocation1 [shape = 'u32[144,128]{1,0:T(1,128)}', space=vmem, size = 0x12000, scoped, tag = 'internal scratch']
  %s0 = inlined_call_operand.vmem [shape: f32[8,128], index: 0, kind: input, shape index: {}]
  %s1 = inlined_call_operand.vmem [shape: f32[128,128], index: 1, kind: input, shape index: {}]
  %s2 = inlined_call_operand.vmem [shape: f32[1,128], index: 2, kind: input, shape index: {}]
  %s3 = inlined_call_operand.hbm [shape: f32[8,128], index: 3, kind: output, shape index: {}]
  %s4 = sld [smem:[#allocation0]]
  $region26: #{linear_model.1} parent=0
    _
  %s6 = ssub.s32 1, %s4
  %s7 = scalar_select 0, %s6, %s4
  $region1: #{linear_model.1} parent=0
    #allocation2 [shape = 'u8[4096]{0}', space=vmem, size = 0x1000, scoped, tag = 'output window, operand 0, single buffered']
    #allocation3 [shape = 's32[1]{0}', space=sflag, size = 0x4, scoped, tag = 'scoped memory for linear_model.1']
    %8 = vsyncpa [#allocation3], 0
    // Predicated region
    $region2: #{linear_model.1} parent=1 // pred_check
      _
    $region3: #{linear_model.1} parent=1 // pred_check_branch
      %10 = sbr.rel (0) target = $region5
    $region4: #{linear_model.1} parent=1 // pred_region
      _
    $region5: #{linear_model.1} parent=1 // pred_fallthru
      _
    // Predicated region
    $region6: #{linear_model.1} parent=1 // pred_check
      _
    $region7: #{linear_model.1} parent=1 // pred_check_branch
      %12 = sbr.rel (0) target = $region9
    $region8: #{linear_model.1} parent=1 // pred_region
      _
    $region9: #{linear_model.1} parent=1 // pred_fallthru
      _
    // Predicated region
    $region10: #{linear_model.1} parent=1 // pred_check
      _
    $region11: #{linear_model.1} parent=1 // pred_check_branch
      %14 = sbr.rel (0) target = $region13
    $region12: #{linear_model.1} parent=1 // pred_region
      _
    $region13: #{linear_model.1} parent=1 // pred_fallthru
      _
    %p15 = scmp.eq.s32.totalorder 0, 0
    // Predicated region
    $region14: #{linear_model.1} parent=1 // pred_check
      %p16 = pneg %p15
    $region15: #{linear_model.1} parent=1 // pred_check_branch
      %18 = sbr.rel (%p16) target = $region17
    $region16: #{linear_model.1} parent=1 // pred_region
      %v19 = vld [vmem:[%s2] sm:$0x1]
      %v21 = vlaneseq
      %v22 = vshrl.u32 %v21, 7
      %v23 = vsub.s32 0, %v22
      %v24 = vrot.slane %v19, %v23
      %26 = vst [vmem:[#allocation2] sm:$0xff] %v24
    $region17: #{linear_model.1} parent=1 // pred_fallthru
      _
    %v27 = vld [vmem:[#allocation2] sm:$0xff]
    %v28 = vld [vmem:[%s0] sm:$0xff]
    %v29 = vld [vmem:[%s1] sm:$0xff]
    %v30 = vld [vmem:[%s1 + $0x8] sm:$0xff]
    %v31 = vld [vmem:[%s1 + $0x10] sm:$0xff]
    %v32 = vld [vmem:[%s1 + $0x18] sm:$0xff]
    %v33 = vld [vmem:[%s1 + $0x20] sm:$0xff]
    %v34 = vld [vmem:[%s1 + $0x28] sm:$0xff]
    %v35 = vld [vmem:[%s1 + $0x30] sm:$0xff]
    %v36 = vld [vmem:[%s1 + $0x38] sm:$0xff]
    %v37 = vld [vmem:[%s1 + $0x40] sm:$0xff]
    %v38 = vld [vmem:[%s1 + $0x48] sm:$0xff]
    %v39 = vld [vmem:[%s1 + $0x50] sm:$0xff]
    %v40 = vld [vmem:[%s1 + $0x58] sm:$0xff]
    %v41 = vld [vmem:[%s1 + $0x60] sm:$0xff]
    %v42 = vld [vmem:[%s1 + $0x68] sm:$0xff]
    %v43 = vld [vmem:[%s1 + $0x70] sm:$0xff]
    %v44 = vld [vmem:[%s1 + $0x78] sm:$0xff]
    %45 = vmatprep.subr.mxu0 0.0
    %46 = vmatpush1.xpose.msra.mxu0 %v29
    %47 = vmatprep.subr.mxu0 0.0
    %48 = vmatpush1.xpose.msra.mxu0 %v30
    %49 = vmatprep.subr.mxu0 0.0
    %50 = vmatpush1.xpose.msra.mxu0 %v31
    %51 = vmatprep.subr.mxu0 0.0
    %52 = vmatpush1.xpose.msra.mxu0 %v32
    %53 = vmatprep.subr.mxu0 0.0
    %54 = vmatpush1.xpose.msra.mxu0 %v33
    %55 = vmatprep.subr.mxu0 0.0
    %56 = vmatpush1.xpose.msra.mxu0 %v34
    %57 = vmatprep.subr.mxu0 0.0
    %58 = vmatpush1.xpose.msra.mxu0 %v35
    %59 = vmatprep.subr.mxu0 0.0
    %60 = vmatpush1.xpose.msra.mxu0 %v36
    %61 = vmatprep.subr.mxu0 0.0
    %62 = vmatpush1.xpose.msra.mxu0 %v37
    %63 = vmatprep.subr.mxu0 0.0
    %64 = vmatpush1.xpose.msra.mxu0 %v38
    %65 = vmatprep.subr.mxu0 0.0
    %66 = vmatpush1.xpose.msra.mxu0 %v39
    %67 = vmatprep.subr.mxu0 0.0
    %68 = vmatpush1.xpose.msra.mxu0 %v40
    %69 = vmatprep.subr.mxu0 0.0
    %70 = vmatpush1.xpose.msra.mxu0 %v41
    %71 = vmatprep.subr.mxu0 0.0
    %72 = vmatpush1.xpose.msra.mxu0 %v42
    %73 = vmatprep.subr.mxu0 0.0
    %74 = vmatpush1.xpose.msra.mxu0 %v43
    %75 = vmatprep.subr.mxu0 0.0
    %76 = vmatpush1.xpose.msra.mxu0 %v44
    %77 = vmatprep.subr.mxu0 0.0
    %78 = vmatpush1.xpose.msra.mxu0 0.0
    %79 = vmatprep.subr.mxu0 0.0
    %80 = vmatpush1.xpose.msra.mxu0 0.0
    %81 = vmatprep.subr.mxu0 0.0
    %82 = vmatpush1.xpose.msra.mxu0 0.0
    %83 = vmatprep.subr.mxu0 0.0
    %84 = vmatpush1.xpose.msra.mxu0 0.0
    %85 = vmatprep.subr.mxu0 0.0
    %86 = vmatpush1.xpose.msra.mxu0 0.0
    %87 = vmatprep.subr.mxu0 0.0
    %88 = vmatpush1.xpose.msra.mxu0 0.0
    %89 = vmatprep.subr.mxu0 0.0
    %90 = vmatpush1.xpose.msra.mxu0 0.0
    %91 = vmatprep.subr.mxu0 0.0
    %92 = vmatpush1.xpose.msra.mxu0 0.0
    %93 = vmatprep.subr.mxu0 0.0
    %94 = vmatpush1.xpose.msra.mxu0 0.0
    %95 = vmatprep.subr.mxu0 0.0
    %96 = vmatpush1.xpose.msra.mxu0 0.0
    %97 = vmatprep.subr.mxu0 0.0
    %98 = vmatpush1.xpose.msra.mxu0 0.0
    %99 = vmatprep.subr.mxu0 0.0
    %100 = vmatpush1.xpose.msra.mxu0 0.0
    %101 = vmatprep.subr.mxu0 0.0
    %102 = vmatpush1.xpose.msra.mxu0 0.0
    %103 = vmatprep.subr.mxu0 0.0
    %104 = vmatpush1.xpose.msra.mxu0 0.0
    %105 = vmatprep.subr.mxu0 0.0
    %106 = vmatpush1.xpose.msra.mxu0 0.0
    %107 = vmatprep.subr.mxu0 0.0
    %108 = vmatpush1.xpose.msra.mxu0 0.0
    %109 = vmatprep.mubr.f32.mxu0 0.0
    %110 = vmatmul.mubr.f32.gmra.mrb[0].mxu0 %v28
    %v111 = vpop.f32.mrb[0].mxu0
    %v112 = vadd.f32 0.0, %v111
    %v113 = vpop.f32.mrb[0].mxu0
    %114 = vdwg.mxu0
    %v115 = vadd.f32 %v27, %v112
    %116 = vst [vmem:[#allocation2] sm:$0xff] %v115
    // Predicated region
    $region18: #{linear_model.1} parent=1 // pred_check
      _
    $region19: #{linear_model.1} parent=1 // pred_check_branch
      %118 = sbr.rel (0) target = $region21
    $region20: #{linear_model.1} parent=1 // pred_region
      %s120 = ssub.s32 128, 128
      %121 = vsyncadd [#allocation3], %s120
      %s123 = sshll.u32 [#allocation2], 4
      %s124 = int_to_ptr.vmem [resolvable:$true] %s123
      %126 = dma.vmem_to_hbm [thread:$0]  %s124, 128, %s3, [#allocation3]
    $region21: #{linear_model.1} parent=1 // pred_fallthru
      _
    // Predicated region
    $region22: #{linear_model.1} parent=1 // pred_check
      _
    $region23: #{linear_model.1} parent=1 // pred_check_branch
      %128 = sbr.rel (0) target = $region25
    $region24: #{linear_model.1} parent=1 // pred_region
      %129 = dma.done [#allocation3], 128
    $region25: #{linear_model.1} parent=1 // pred_fallthru
      _
    %130 = vsyncpa [#allocation3], 1

</llo_original>
